<compile_context>
chip_gen: v7x
topology: tpu7x:2x2x1
jax: 0.10.0
libtpu: 0.0.40
codegen_flags: <defaults>
</compile_context>

<pallas_src>
import functools

import jax
import jax.numpy as jnp
import numpy as np
from jax.experimental import pallas as pl
from jax.experimental.pallas import tpu as pltpu


# ---------------------------------------------------------------------------
# pltpu.roll rotation-convention probe (one tiny pallas_call, cached).  If the
# probe cannot run or gives an unexpected result we fall back to jnp.roll so
# correctness never depends on the convention.
# ---------------------------------------------------------------------------
@functools.lru_cache(maxsize=None)
def _roll_mode():
  try:
    def probe(o_ref):
      lane = jax.lax.broadcasted_iota(jnp.int32, (8, 128), 1).astype(jnp.float32)
      o_ref[...] = pltpu.roll(lane, 1, 1)

    out = np.asarray(
        pl.pallas_call(
            probe, out_shape=jax.ShapeDtypeStruct((8, 128), jnp.float32))())
    if out[0, 0] == 127.0 and out[0, 1] == 0.0:
      return "pltpu"        # pltpu.roll(x, k) == jnp.roll(x, k)
    if out[0, 0] == 1.0 and out[0, 127] == 0.0:
      return "pltpu_inv"    # pltpu.roll(x, k) == jnp.roll(x, -k)
  except Exception:
    pass
  return "jnp"              # safe fallback


def _lane_shift(v, sft, n, mode):
  """out[:, i] = v[:, (i + sft) % n]   (i.e. jnp.roll(v, -sft, axis=1))."""
  if mode == "pltpu":
    return pltpu.roll(v, (-sft) % n, 1)
  if mode == "pltpu_inv":
    return pltpu.roll(v, sft % n, 1)
  return jnp.roll(v, -sft, axis=1)


def _default_batch_blocks(batch):
  """One fat block on single-TC chips (v5e/v6e); 2-way parallel split on
  chips with two TensorCores (e.g. v7x) so both cores get work."""
  try:
    kind = jax.devices()[0].device_kind.lower()
  except Exception:
    kind = ""
  single_tc = any(t in kind for t in ("v5 lite", "v5e", "v6 lite", "v6e"))
  blocks = 1 if single_tc else min(2, batch)
  while blocks > 1 and batch % blocks:
    blocks -= 1
  return max(blocks, 1)


# ---------------------------------------------------------------------------
# Kernel
# ---------------------------------------------------------------------------
def _style_conv_block_initial_kernel(
    const_ref,    # [C, Nb]      learned constant, tiled per lane-folded image
    noise_ref,    # [1, Nb]      raw noise for this block's images
    wbn_ref,      # [C, 9C + 3]  [conv taps | conv bias | noise_w1 | noise_w2]
    sty_ref,      # [bpb, C, 4]  per-image AdaIN columns (f1, s1, f2, s2)
    bmask_ref,    # [9, Nb]      per-tap border-validity masks (0/1 f32)
    out_ref,      # [C, Nb]
    stk_ref,      # [9C, Nb]     VMEM scratch: stacked shifted taps (im2col)
    *, C, H, W, bpb, roll_mode):
  HW = H * W
  Nb = bpb * HW
  eps = jnp.float32(1e-5)

  wbn = wbn_ref[...]
  w_mat = wbn[:, :9 * C]                      # [C, 9C]
  bias = wbn[:, 9 * C + 0:9 * C + 1]          # [C, 1]
  nw1 = wbn[:, 9 * C + 1:9 * C + 2]           # [C, 1]
  nw2 = wbn[:, 9 * C + 2:9 * C + 3]           # [C, 1]
  sty = sty_ref[...]                          # [bpb, C, 4]
  noise = noise_ref[...]                      # [1, Nb]

  def adain_lrelu(x, f_col, s_col):
    # Per-image InstanceNorm2d (biased var, eps=1e-5) + style scale/shift +
    # LeakyReLU(0.2).  Images occupy contiguous, 128-aligned lane segments.
    segs = []
    for b in range(bpb):
      xb = x[:, b * HW:(b + 1) * HW]                        # [C, HW]
      f = sty[b, :, f_col:f_col + 1]                        # [C, 1]
      s = sty[b, :, s_col:s_col + 1]                        # [C, 1]
      mean = jnp.mean(xb, axis=1, keepdims=True)
      ex2 = jnp.mean(xb * xb, axis=1, keepdims=True)
      var = jnp.maximum(ex2 - mean * mean, 0.0)
      scale = jax.lax.rsqrt(var + eps) * f                  # [C, 1]
      shift = s - mean * scale                              # [C, 1]
      y = xb * scale + shift
      segs.append(jnp.maximum(y, 0.2 * y))                  # LeakyReLU(0.2)
    return segs[0] if bpb == 1 else jnp.concatenate(segs, axis=1)

  # --- constant + scaled noise 1 -> AdaIN(style1) -> LeakyReLU ---
  x = const_ref[...] + noise * nw1
  x = adain_lrelu(x, 0, 1)

  # --- 3x3 same-padding conv as ONE MXU matmul ---
  # Build the [9C, Nb] im2col operand from lane-rotated, border-masked copies
  # of x; the masks (precomputed in the wrapper) also zero any wrap across
  # image / batch-segment boundaries.  Then [C, 9C] @ [9C, Nb].
  bm = bmask_ref[...]
  for ky in range(3):
    for kx in range(3):
      t = ky * 3 + kx
      sft = (ky - 1) * W + (kx - 1)
      if sft == 0:
        xs = x
      else:
        xs = _lane_shift(x, sft, Nb, roll_mode) * bm[t:t + 1, :]
      stk_ref[t * C:(t + 1) * C, :] = xs
  x = jnp.dot(w_mat, stk_ref[...], preferred_element_type=jnp.float32) + bias

  # --- + scaled noise 2 -> AdaIN(style2) -> LeakyReLU ---
  x = x + noise * nw2
  x = adain_lrelu(x, 2, 3)

  out_ref[...] = x.astype(out_ref.dtype)


# ---------------------------------------------------------------------------
# Wrapper
# ---------------------------------------------------------------------------
def style_conv_block_initial(latent, noise_nchw, params, batch_blocks=None):
  """Mirrors StyleConvBlockInitial.forward(latent_, noise); returns NCHW."""
  B = noise_nchw.shape[0]
  const = params["constant"]                       # [1, C, H, W]
  _, C, H, W = const.shape
  HW = H * W
  if batch_blocks is None:
    batch_blocks = _default_batch_blocks(B)
  G = batch_blocks
  assert B % G == 0
  bpb = B // G                                     # images folded per grid step
  Nb = bpb * HW                                    # lane width per block
  f32 = jnp.float32
  hp = jax.lax.Precision.HIGHEST

  # ---- grid-invariant packs (tiny, built once at trace time) ----
  const_tiled = jnp.tile(const.reshape(C, HW).astype(f32), (1, bpb))    # [C, Nb]
  w_flat = jnp.transpose(params["w_oihw"].astype(f32),
                         (0, 2, 3, 1)).reshape(C, 9 * C)                # [C, 9C]
  wbn = jnp.concatenate(
      [w_flat,
       params["b"].reshape(C, 1).astype(f32),
       params["nw1"].reshape(C, 1).astype(f32),
       params["nw2"].reshape(C, 1).astype(f32)], axis=1)                # [C, 9C+3]

  # Border-validity masks for the 9 conv taps (output-position masks), tiled
  # across the bpb lane-folded images (numpy constants).
  hh = np.arange(H)[:, None]
  ww = np.arange(W)[None, :]
  bmask_np = np.empty((9, H, W), np.float32)
  for ky in range(3):
    for kx in range(3):
      dy, dx = ky - 1, kx - 1
      bmask_np[ky * 3 + kx] = (((hh + dy) >= 0) & ((hh + dy) < H) &
                               ((ww + dx) >= 0) & ((ww + dx) < W))
  bmask = jnp.asarray(np.tile(bmask_np.reshape(9, HW), (1, bpb)))       # [9, Nb]

  # ---- per-batch style affine (two tiny [B,L]@[L,2C] matmuls, kept in XLA) ----
  lat = latent.astype(f32)
  style1 = jnp.dot(lat, params["sw1"], precision=hp) + params["sb1"][None, :]
  style2 = jnp.dot(lat, params["sw2"], precision=hp) + params["sb2"][None, :]
  sty = jnp.stack([style1[:, :C], style1[:, C:],
                   style2[:, :C], style2[:, C:]], axis=-1)              # [B, C, 4]

  # Raw noise, lane-folded per block (no wrapper-side pre-scaling).
  noise_lanes = noise_nchw.astype(f32).reshape(G, 1, Nb)                # [G, 1, Nb]

  kernel = functools.partial(_style_conv_block_initial_kernel,
                             C=C, H=H, W=W, bpb=bpb, roll_mode=_roll_mode())

  out = pl.pallas_call(
      kernel,
      out_shape=jax.ShapeDtypeStruct((G, C, Nb), f32),
      grid_spec=pltpu.PrefetchScalarGridSpec(
          num_scalar_prefetch=0,
          grid=(G,),
          in_specs=[
              pl.BlockSpec((C, Nb), lambda g: (0, 0)),            # constant (invariant)
              pl.BlockSpec((None, 1, Nb), lambda g: (g, 0, 0)),   # raw noise
              pl.BlockSpec((C, 9 * C + 3), lambda g: (0, 0)),     # taps|bias|nw (invariant)
              pl.BlockSpec((bpb, C, 4), lambda g: (g, 0, 0)),     # AdaIN styles
              pl.BlockSpec((9, Nb), lambda g: (0, 0)),            # border masks (invariant)
          ],
          out_specs=pl.BlockSpec((None, C, Nb), lambda g: (g, 0, 0)),
          scratch_shapes=[pltpu.VMEM((9 * C, Nb), jnp.float32)],  # im2col scratch
      ),
      compiler_params=pltpu.CompilerParams(
          dimension_semantics=("parallel",)),
  )(const_tiled, noise_lanes, wbn, sty, bmask)

  # [G, C, bpb*HW] -> [B, C, H, W]
  return (out.reshape(G, C, bpb, H, W)
             .transpose(0, 2, 1, 3, 4)
             .reshape(B, C, H, W))


# ---------------------------------------------------------------------------
# Synthetic params + pure-JAX reference
# ---------------------------------------------------------------------------
def init_params(key, in_channels, latent_dim, dim_input):
  """Deterministic synthetic params; equalized-lr scales folded into weights."""
  C, L = in_channels, latent_dim
  ks = jax.random.split(key, 7)
  conv_scale = np.sqrt(2.0 / (C * 3 * 3))
  style_scale = np.sqrt(2.0 / L)
  # LearnedAffineTrans_A bias init: first half (scale) = 1, second half (shift) = 0.
  sb = jnp.concatenate([jnp.ones((C,), jnp.float32), jnp.zeros((C,), jnp.float32)])
  return dict(
      constant=jax.random.normal(ks[0], (1, C, dim_input, dim_input), jnp.float32),
      w_oihw=jax.random.normal(ks[1], (C, C, 3, 3), jnp.float32) * conv_scale,
      b=jax.random.normal(ks[2], (C,), jnp.float32) * 0.1,
      # ScaleNoiseB_ weights are zero-initialized in the original repo; use
      # nonzero values here so the noise path is actually exercised.
      nw1=jax.random.normal(ks[3], (C,), jnp.float32) * 0.1,
      nw2=jax.random.normal(ks[4], (C,), jnp.float32) * 0.1,
      sw1=(jax.random.normal(ks[5], (2 * C, L), jnp.float32) * style_scale).T,
      sb1=sb,
      sw2=(jax.random.normal(ks[6], (2 * C, L), jnp.float32) * style_scale).T,
      sb2=sb,
  )


def reference_forward(latent, noise_nchw, p):
  """Pure-JAX NCHW reference matching the PyTorch module semantics."""
  hp = jax.lax.Precision.HIGHEST
  B = noise_nchw.shape[0]
  C = p["constant"].shape[1]
  lrelu = lambda v: jnp.where(v >= 0, v, 0.2 * v)

  def adain(x, style):
    mean = jnp.mean(x, axis=(2, 3), keepdims=True)
    var = jnp.mean((x - mean) ** 2, axis=(2, 3), keepdims=True)
    xn = (x - mean) / jnp.sqrt(var + 1e-5)
    return xn * style[:, :C, None, None] + style[:, C:, None, None]

  x = jnp.tile(p["constant"], (B, 1, 1, 1))
  x = x + noise_nchw * p["nw1"][None, :, None, None]
  x = lrelu(adain(x, jnp.dot(latent, p["sw1"], precision=hp) + p["sb1"][None, :]))
  x = jax.lax.conv_general_dilated(
      x, p["w_oihw"], window_strides=(1, 1), padding=((1, 1), (1, 1)),
      dimension_numbers=("NCHW", "OIHW", "NCHW"), precision=hp)
  x = x + p["b"][None, :, None, None]
  x = x + noise_nchw * p["nw2"][None, :, None, None]
  x = lrelu(adain(x, jnp.dot(latent, p["sw2"], precision=hp) + p["sb2"][None, :]))
  return x


if __name__ == "__main__":
  B, C, H, L = 2, 8, 16, 32          # batch, in_channels, dim_input, dim_latent
  key = jax.random.PRNGKey(0)
  k_lat, k_noise, k_params = jax.random.split(key, 3)

  latent = jax.random.normal(k_lat, (B, L), jnp.float32)            # latent_
  noise = jax.random.normal(k_noise, (B, 1, H, H), jnp.float32)     # noise (NCHW)
  params = init_params(k_params, C, L, H)

  _roll_mode()   # prime the roll-convention probe eagerly (outside jit tracing)

  fwd = jax.jit(style_conv_block_initial)
  out = jax.block_until_ready(fwd(latent, noise, params))

  ref = reference_forward(latent, noise, params)
  np.testing.assert_allclose(np.asarray(out), np.asarray(ref), atol=1e-3, rtol=1e-3)
  print("KERNEL_OK")
</pallas_src>

<mosaic_0001>
module attributes {stable_mosaic.version = 11 : i64} {
  func.func @_style_conv_block_initial_kernel(%arg0: i32, %arg1: memref<8x256xf32, #tpu.memory_space<vmem>>, %arg2: memref<1x1x256xf32, #tpu.memory_space<vmem>>, %arg3: memref<8x75xf32, #tpu.memory_space<vmem>>, %arg4: memref<1x8x4xf32, #tpu.memory_space<vmem>>, %arg5: memref<9x256xf32, #tpu.memory_space<vmem>>, %arg6: memref<1x8x256xf32, #tpu.memory_space<vmem>>, %arg7: memref<72x256xf32, #tpu.memory_space<vmem>>) attributes {dimension_semantics = [#tpu.dimension_semantics<parallel>], iteration_bounds = array<i64: 2>, scalar_prefetch = 0 : i64, scratch_operands = 1 : i64, tpu.core_type = #tpu.core_type<tc>, window_params = [{pipeline_mode = #tpu.pipeline_mode<synchronous>, transform_indices = @transform_0, window_bounds = array<i64: 8, 256>}, {transform_indices = @transform_1, window_bounds = array<i64: 1, 1, 256>}, {pipeline_mode = #tpu.pipeline_mode<synchronous>, transform_indices = @transform_2, window_bounds = array<i64: 8, 75>}, {transform_indices = @transform_3, window_bounds = array<i64: 1, 8, 4>}, {pipeline_mode = #tpu.pipeline_mode<synchronous>, transform_indices = @transform_4, window_bounds = array<i64: 9, 256>}, {transform_indices = @transform_5, window_bounds = array<i64: 1, 8, 256>}]} {
    %c0 = arith.constant 0 : index
    %c0_0 = arith.constant 0 : index
    %0 = vector.load %arg3[%c0, %c0_0] : memref<8x75xf32, #tpu.memory_space<vmem>>, vector<8x75xf32>
    %1 = vector.extract_strided_slice %0 {offsets = [0, 0], sizes = [8, 72], strides = [1, 1]} : vector<8x75xf32> to vector<8x72xf32>
    %2 = vector.extract_strided_slice %0 {offsets = [0, 72], sizes = [8, 1], strides = [1, 1]} : vector<8x75xf32> to vector<8x1xf32>
    %3 = vector.extract_strided_slice %0 {offsets = [0, 73], sizes = [8, 1], strides = [1, 1]} : vector<8x75xf32> to vector<8x1xf32>
    %4 = vector.extract_strided_slice %0 {offsets = [0, 74], sizes = [8, 1], strides = [1, 1]} : vector<8x75xf32> to vector<8x1xf32>
    %c0_1 = arith.constant 0 : index
    %c0_2 = arith.constant 0 : index
    %c0_3 = arith.constant 0 : index
    %5 = vector.load %arg4[%c0_1, %c0_2, %c0_3] : memref<1x8x4xf32, #tpu.memory_space<vmem>>, vector<1x8x4xf32>
    %c0_4 = arith.constant 0 : index
    %c0_5 = arith.constant 0 : index
    %c0_6 = arith.constant 0 : index
    %6 = vector.load %arg2[%c0_4, %c0_5, %c0_6] : memref<1x1x256xf32, #tpu.memory_space<vmem>>, vector<1x1x256xf32>
    %7 = vector.shape_cast %6 : vector<1x1x256xf32> to vector<1x256xf32>
    %c0_7 = arith.constant 0 : index
    %c0_8 = arith.constant 0 : index
    %8 = vector.load %arg1[%c0_7, %c0_8] : memref<8x256xf32, #tpu.memory_space<vmem>>, vector<8x256xf32>
    %9 = vector.broadcast %7 : vector<1x256xf32> to vector<8x256xf32>
    %10 = vector.broadcast %3 : vector<8x1xf32> to vector<8x256xf32>
    %11 = arith.mulf %9, %10 : vector<8x256xf32>
    %12 = arith.addf %8, %11 : vector<8x256xf32>
    %13 = vector.extract_strided_slice %5 {offsets = [0, 0, 0], sizes = [1, 8, 1], strides = [1, 1, 1]} : vector<1x8x4xf32> to vector<1x8x1xf32>
    %14 = vector.shape_cast %13 : vector<1x8x1xf32> to vector<8x1xf32>
    %15 = vector.extract_strided_slice %5 {offsets = [0, 0, 1], sizes = [1, 8, 1], strides = [1, 1, 1]} : vector<1x8x4xf32> to vector<1x8x1xf32>
    %16 = vector.shape_cast %15 : vector<1x8x1xf32> to vector<8x1xf32>
    %cst = arith.constant dense<0.000000e+00> : vector<8xf32>
    %17 = vector.multi_reduction <add>, %12, %cst [1] : vector<8x256xf32> to vector<8xf32>
    %18 = vector.shape_cast %17 : vector<8xf32> to vector<8x1xf32>
    %cst_9 = arith.constant 2.560000e+02 : f32
    %19 = vector.broadcast %cst_9 : f32 to vector<8x1xf32>
    %20 = arith.divf %18, %19 : vector<8x1xf32>
    %21 = arith.mulf %12, %12 : vector<8x256xf32>
    %cst_10 = arith.constant dense<0.000000e+00> : vector<8xf32>
    %22 = vector.multi_reduction <add>, %21, %cst_10 [1] : vector<8x256xf32> to vector<8xf32>
    %23 = vector.shape_cast %22 : vector<8xf32> to vector<8x1xf32>
    %cst_11 = arith.constant 2.560000e+02 : f32
    %24 = vector.broadcast %cst_11 : f32 to vector<8x1xf32>
    %25 = arith.divf %23, %24 : vector<8x1xf32>
    %26 = arith.mulf %20, %20 : vector<8x1xf32>
    %27 = arith.subf %25, %26 : vector<8x1xf32>
    %cst_12 = arith.constant 0.000000e+00 : f32
    %28 = vector.broadcast %cst_12 : f32 to vector<8x1xf32>
    %29 = arith.maximumf %27, %28 : vector<8x1xf32>
    %cst_13 = arith.constant 9.99999974E-6 : f32
    %30 = vector.broadcast %cst_13 : f32 to vector<8x1xf32>
    %31 = arith.addf %29, %30 : vector<8x1xf32>
    %32 = math.rsqrt %31 : vector<8x1xf32>
    %33 = arith.mulf %32, %14 : vector<8x1xf32>
    %34 = arith.mulf %20, %33 : vector<8x1xf32>
    %35 = arith.subf %16, %34 : vector<8x1xf32>
    %36 = vector.broadcast %33 : vector<8x1xf32> to vector<8x256xf32>
    %37 = arith.mulf %12, %36 : vector<8x256xf32>
    %38 = vector.broadcast %35 : vector<8x1xf32> to vector<8x256xf32>
    %39 = arith.addf %37, %38 : vector<8x256xf32>
    %cst_14 = arith.constant 2.000000e-01 : f32
    %40 = vector.broadcast %cst_14 : f32 to vector<8x256xf32>
    %41 = arith.mulf %40, %39 : vector<8x256xf32>
    %42 = arith.maximumf %39, %41 : vector<8x256xf32>
    %c0_15 = arith.constant 0 : index
    %c0_16 = arith.constant 0 : index
    %43 = vector.load %arg5[%c0_15, %c0_16] : memref<9x256xf32, #tpu.memory_space<vmem>>, vector<9x256xf32>
    %44 = vector.extract_strided_slice %42 {offsets = [0, 239], sizes = [8, 17], strides = [1, 1]} : vector<8x256xf32> to vector<8x17xf32>
    %45 = vector.extract_strided_slice %42 {offsets = [0, 0], sizes = [8, 239], strides = [1, 1]} : vector<8x256xf32> to vector<8x239xf32>
    %46 = tpu.concatenate %44, %45 in 1 : vector<8x17xf32>, vector<8x239xf32> -> vector<8x256xf32>
    %47 = vector.extract_strided_slice %43 {offsets = [0, 0], sizes = [1, 256], strides = [1, 1]} : vector<9x256xf32> to vector<1x256xf32>
    %48 = vector.broadcast %47 : vector<1x256xf32> to vector<8x256xf32>
    %49 = arith.mulf %46, %48 : vector<8x256xf32>
    %c0_17 = arith.constant 0 : index
    %c0_18 = arith.constant 0 : index
    %50 = vector.load %arg7[%c0_17, %c0_18] : memref<72x256xf32, #tpu.memory_space<vmem>>, vector<8x256xf32>
    tpu.vector_store %arg7[%c0_17, %c0_18], %49 {strides = array<i32>} : memref<72x256xf32, #tpu.memory_space<vmem>>, vector<8x256xf32>,
    %51 = vector.extract_strided_slice %42 {offsets = [0, 240], sizes = [8, 16], strides = [1, 1]} : vector<8x256xf32> to vector<8x16xf32>
    %52 = vector.extract_strided_slice %42 {offsets = [0, 0], sizes = [8, 240], strides = [1, 1]} : vector<8x256xf32> to vector<8x240xf32>
    %53 = tpu.concatenate %51, %52 in 1 : vector<8x16xf32>, vector<8x240xf32> -> vector<8x256xf32>
    %54 = vector.extract_strided_slice %43 {offsets = [1, 0], sizes = [1, 256], strides = [1, 1]} : vector<9x256xf32> to vector<1x256xf32>
    %55 = vector.broadcast %54 : vector<1x256xf32> to vector<8x256xf32>
    %56 = arith.mulf %53, %55 : vector<8x256xf32>
    %c8 = arith.constant 8 : index
    %c0_19 = arith.constant 0 : index
    %57 = vector.load %arg7[%c8, %c0_19] : memref<72x256xf32, #tpu.memory_space<vmem>>, vector<8x256xf32>
    tpu.vector_store %arg7[%c8, %c0_19], %56 {strides = array<i32>} : memref<72x256xf32, #tpu.memory_space<vmem>>, vector<8x256xf32>,
    %58 = vector.extract_strided_slice %42 {offsets = [0, 241], sizes = [8, 15], strides = [1, 1]} : vector<8x256xf32> to vector<8x15xf32>
    %59 = vector.extract_strided_slice %42 {offsets = [0, 0], sizes = [8, 241], strides = [1, 1]} : vector<8x256xf32> to vector<8x241xf32>
    %60 = tpu.concatenate %58, %59 in 1 : vector<8x15xf32>, vector<8x241xf32> -> vector<8x256xf32>
    %61 = vector.extract_strided_slice %43 {offsets = [2, 0], sizes = [1, 256], strides = [1, 1]} : vector<9x256xf32> to vector<1x256xf32>
    %62 = vector.broadcast %61 : vector<1x256xf32> to vector<8x256xf32>
    %63 = arith.mulf %60, %62 : vector<8x256xf32>
    %c16 = arith.constant 16 : index
    %c0_20 = arith.constant 0 : index
    %64 = vector.load %arg7[%c16, %c0_20] : memref<72x256xf32, #tpu.memory_space<vmem>>, vector<8x256xf32>
    tpu.vector_store %arg7[%c16, %c0_20], %63 {strides = array<i32>} : memref<72x256xf32, #tpu.memory_space<vmem>>, vector<8x256xf32>,
    %65 = vector.extract_strided_slice %42 {offsets = [0, 255], sizes = [8, 1], strides = [1, 1]} : vector<8x256xf32> to vector<8x1xf32>
    %66 = vector.extract_strided_slice %42 {offsets = [0, 0], sizes = [8, 255], strides = [1, 1]} : vector<8x256xf32> to vector<8x255xf32>
    %67 = tpu.concatenate %65, %66 in 1 : vector<8x1xf32>, vector<8x255xf32> -> vector<8x256xf32>
    %68 = vector.extract_strided_slice %43 {offsets = [3, 0], sizes = [1, 256], strides = [1, 1]} : vector<9x256xf32> to vector<1x256xf32>
    %69 = vector.broadcast %68 : vector<1x256xf32> to vector<8x256xf32>
    %70 = arith.mulf %67, %69 : vector<8x256xf32>
    %c24 = arith.constant 24 : index
    %c0_21 = arith.constant 0 : index
    %71 = vector.load %arg7[%c24, %c0_21] : memref<72x256xf32, #tpu.memory_space<vmem>>, vector<8x256xf32>
    tpu.vector_store %arg7[%c24, %c0_21], %70 {strides = array<i32>} : memref<72x256xf32, #tpu.memory_space<vmem>>, vector<8x256xf32>,
    %c32 = arith.constant 32 : index
    %c0_22 = arith.constant 0 : index
    %72 = vector.load %arg7[%c32, %c0_22] : memref<72x256xf32, #tpu.memory_space<vmem>>, vector<8x256xf32>
    tpu.vector_store %arg7[%c32, %c0_22], %42 {strides = array<i32>} : memref<72x256xf32, #tpu.memory_space<vmem>>, vector<8x256xf32>,
    %73 = vector.extract_strided_slice %42 {offsets = [0, 1], sizes = [8, 255], strides = [1, 1]} : vector<8x256xf32> to vector<8x255xf32>
    %74 = vector.extract_strided_slice %42 {offsets = [0, 0], sizes = [8, 1], strides = [1, 1]} : vector<8x256xf32> to vector<8x1xf32>
    %75 = tpu.concatenate %73, %74 in 1 : vector<8x255xf32>, vector<8x1xf32> -> vector<8x256xf32>
    %76 = vector.extract_strided_slice %43 {offsets = [5, 0], sizes = [1, 256], strides = [1, 1]} : vector<9x256xf32> to vector<1x256xf32>
    %77 = vector.broadcast %76 : vector<1x256xf32> to vector<8x256xf32>
    %78 = arith.mulf %75, %77 : vector<8x256xf32>
    %c40 = arith.constant 40 : index
    %c0_23 = arith.constant 0 : index
    %79 = vector.load %arg7[%c40, %c0_23] : memref<72x256xf32, #tpu.memory_space<vmem>>, vector<8x256xf32>
    tpu.vector_store %arg7[%c40, %c0_23], %78 {strides = array<i32>} : memref<72x256xf32, #tpu.memory_space<vmem>>, vector<8x256xf32>,
    %80 = vector.extract_strided_slice %42 {offsets = [0, 15], sizes = [8, 241], strides = [1, 1]} : vector<8x256xf32> to vector<8x241xf32>
    %81 = vector.extract_strided_slice %42 {offsets = [0, 0], sizes = [8, 15], strides = [1, 1]} : vector<8x256xf32> to vector<8x15xf32>
    %82 = tpu.concatenate %80, %81 in 1 : vector<8x241xf32>, vector<8x15xf32> -> vector<8x256xf32>
    %83 = vector.extract_strided_slice %43 {offsets = [6, 0], sizes = [1, 256], strides = [1, 1]} : vector<9x256xf32> to vector<1x256xf32>
    %84 = vector.broadcast %83 : vector<1x256xf32> to vector<8x256xf32>
    %85 = arith.mulf %82, %84 : vector<8x256xf32>
    %c48 = arith.constant 48 : index
    %c0_24 = arith.constant 0 : index
    %86 = vector.load %arg7[%c48, %c0_24] : memref<72x256xf32, #tpu.memory_space<vmem>>, vector<8x256xf32>
    tpu.vector_store %arg7[%c48, %c0_24], %85 {strides = array<i32>} : memref<72x256xf32, #tpu.memory_space<vmem>>, vector<8x256xf32>,
    %87 = vector.extract_strided_slice %42 {offsets = [0, 16], sizes = [8, 240], strides = [1, 1]} : vector<8x256xf32> to vector<8x240xf32>
    %88 = vector.extract_strided_slice %42 {offsets = [0, 0], sizes = [8, 16], strides = [1, 1]} : vector<8x256xf32> to vector<8x16xf32>
    %89 = tpu.concatenate %87, %88 in 1 : vector<8x240xf32>, vector<8x16xf32> -> vector<8x256xf32>
    %90 = vector.extract_strided_slice %43 {offsets = [7, 0], sizes = [1, 256], strides = [1, 1]} : vector<9x256xf32> to vector<1x256xf32>
    %91 = vector.broadcast %90 : vector<1x256xf32> to vector<8x256xf32>
    %92 = arith.mulf %89, %91 : vector<8x256xf32>
    %c56 = arith.constant 56 : index
    %c0_25 = arith.constant 0 : index
    %93 = vector.load %arg7[%c56, %c0_25] : memref<72x256xf32, #tpu.memory_space<vmem>>, vector<8x256xf32>
    tpu.vector_store %arg7[%c56, %c0_25], %92 {strides = array<i32>} : memref<72x256xf32, #tpu.memory_space<vmem>>, vector<8x256xf32>,
    %94 = vector.extract_strided_slice %42 {offsets = [0, 17], sizes = [8, 239], strides = [1, 1]} : vector<8x256xf32> to vector<8x239xf32>
    %95 = vector.extract_strided_slice %42 {offsets = [0, 0], sizes = [8, 17], strides = [1, 1]} : vector<8x256xf32> to vector<8x17xf32>
    %96 = tpu.concatenate %94, %95 in 1 : vector<8x239xf32>, vector<8x17xf32> -> vector<8x256xf32>
    %97 = vector.extract_strided_slice %43 {offsets = [8, 0], sizes = [1, 256], strides = [1, 1]} : vector<9x256xf32> to vector<1x256xf32>
    %98 = vector.broadcast %97 : vector<1x256xf32> to vector<8x256xf32>
    %99 = arith.mulf %96, %98 : vector<8x256xf32>
    %c64 = arith.constant 64 : index
    %c0_26 = arith.constant 0 : index
    %100 = vector.load %arg7[%c64, %c0_26] : memref<72x256xf32, #tpu.memory_space<vmem>>, vector<8x256xf32>
    tpu.vector_store %arg7[%c64, %c0_26], %99 {strides = array<i32>} : memref<72x256xf32, #tpu.memory_space<vmem>>, vector<8x256xf32>,
    %c0_27 = arith.constant 0 : index
    %c0_28 = arith.constant 0 : index
    %101 = vector.load %arg7[%c0_27, %c0_28] : memref<72x256xf32, #tpu.memory_space<vmem>>, vector<72x256xf32>
    %cst_29 = arith.constant dense<0.000000e+00> : vector<8x256xf32>
    %102 = tpu.matmul %1, %101, %cst_29 {dimension_numbers = #tpu.dot_dimension_numbers<[1], [0], [0], [1], [0, 0, 1, 1], [], []>} : vector<8x72xf32>, vector<72x256xf32>, vector<8x256xf32> -> vector<8x256xf32>
    %103 = vector.broadcast %2 : vector<8x1xf32> to vector<8x256xf32>
    %104 = arith.addf %102, %103 : vector<8x256xf32>
    %105 = vector.broadcast %7 : vector<1x256xf32> to vector<8x256xf32>
    %106 = vector.broadcast %4 : vector<8x1xf32> to vector<8x256xf32>
    %107 = arith.mulf %105, %106 : vector<8x256xf32>
    %108 = arith.addf %104, %107 : vector<8x256xf32>
    %109 = vector.extract_strided_slice %5 {offsets = [0, 0, 2], sizes = [1, 8, 1], strides = [1, 1, 1]} : vector<1x8x4xf32> to vector<1x8x1xf32>
    %110 = vector.shape_cast %109 : vector<1x8x1xf32> to vector<8x1xf32>
    %111 = vector.extract_strided_slice %5 {offsets = [0, 0, 3], sizes = [1, 8, 1], strides = [1, 1, 1]} : vector<1x8x4xf32> to vector<1x8x1xf32>
    %112 = vector.shape_cast %111 : vector<1x8x1xf32> to vector<8x1xf32>
    %cst_30 = arith.constant dense<0.000000e+00> : vector<8xf32>
    %113 = vector.multi_reduction <add>, %108, %cst_30 [1] : vector<8x256xf32> to vector<8xf32>
    %114 = vector.shape_cast %113 : vector<8xf32> to vector<8x1xf32>
    %cst_31 = arith.constant 2.560000e+02 : f32
    %115 = vector.broadcast %cst_31 : f32 to vector<8x1xf32>
    %116 = arith.divf %114, %115 : vector<8x1xf32>
    %117 = arith.mulf %108, %108 : vector<8x256xf32>
    %cst_32 = arith.constant dense<0.000000e+00> : vector<8xf32>
    %118 = vector.multi_reduction <add>, %117, %cst_32 [1] : vector<8x256xf32> to vector<8xf32>
    %119 = vector.shape_cast %118 : vector<8xf32> to vector<8x1xf32>
    %cst_33 = arith.constant 2.560000e+02 : f32
    %120 = vector.broadcast %cst_33 : f32 to vector<8x1xf32>
    %121 = arith.divf %119, %120 : vector<8x1xf32>
    %122 = arith.mulf %116, %116 : vector<8x1xf32>
    %123 = arith.subf %121, %122 : vector<8x1xf32>
    %cst_34 = arith.constant 0.000000e+00 : f32
    %124 = vector.broadcast %cst_34 : f32 to vector<8x1xf32>
    %125 = arith.maximumf %123, %124 : vector<8x1xf32>
    %cst_35 = arith.constant 9.99999974E-6 : f32
    %126 = vector.broadcast %cst_35 : f32 to vector<8x1xf32>
    %127 = arith.addf %125, %126 : vector<8x1xf32>
    %128 = math.rsqrt %127 : vector<8x1xf32>
    %129 = arith.mulf %128, %110 : vector<8x1xf32>
    %130 = arith.mulf %116, %129 : vector<8x1xf32>
    %131 = arith.subf %112, %130 : vector<8x1xf32>
    %132 = vector.broadcast %129 : vector<8x1xf32> to vector<8x256xf32>
    %133 = arith.mulf %108, %132 : vector<8x256xf32>
    %134 = vector.broadcast %131 : vector<8x1xf32> to vector<8x256xf32>
    %135 = arith.addf %133, %134 : vector<8x256xf32>
    %cst_36 = arith.constant 2.000000e-01 : f32
    %136 = vector.broadcast %cst_36 : f32 to vector<8x256xf32>
    %137 = arith.mulf %136, %135 : vector<8x256xf32>
    %138 = arith.maximumf %135, %137 : vector<8x256xf32>
    %c0_37 = arith.constant 0 : index
    %c0_38 = arith.constant 0 : index
    %c0_39 = arith.constant 0 : index
    %139 = vector.load %arg6[%c0_37, %c0_38, %c0_39] : memref<1x8x256xf32, #tpu.memory_space<vmem>>, vector<1x8x256xf32>
    %140 = vector.shape_cast %139 : vector<1x8x256xf32> to vector<8x256xf32>
    %141 = vector.shape_cast %138 : vector<8x256xf32> to vector<1x8x256xf32>
    tpu.vector_store %arg6[%c0_37, %c0_38, %c0_39], %141 {strides = array<i32>} : memref<1x8x256xf32, #tpu.memory_space<vmem>>, vector<1x8x256xf32>,
    return
  }
  func.func @transform_0(%arg0: i32) -> (i32, i32) {
    %c0_i32 = arith.constant 0 : i32
    %c0_i32_0 = arith.constant 0 : i32
    %c0_i32_1 = arith.constant 0 : i32
    return %c0_i32, %c0_i32_0 : i32, i32
  }
  func.func @transform_1(%arg0: i32) -> (i32, i32, i32) {
    %c0_i32 = arith.constant 0 : i32
    %c0_i32_0 = arith.constant 0 : i32
    %c0_i32_1 = arith.constant 0 : i32
    return %arg0, %c0_i32, %c0_i32_0 : i32, i32, i32
  }
  func.func @transform_2(%arg0: i32) -> (i32, i32) {
    %c0_i32 = arith.constant 0 : i32
    %c0_i32_0 = arith.constant 0 : i32
    %c0_i32_1 = arith.constant 0 : i32
    return %c0_i32, %c0_i32_0 : i32, i32
  }
  func.func @transform_3(%arg0: i32) -> (i32, i32, i32) {
    %c0_i32 = arith.constant 0 : i32
    %c0_i32_0 = arith.constant 0 : i32
    %c0_i32_1 = arith.constant 0 : i32
    return %arg0, %c0_i32, %c0_i32_0 : i32, i32, i32
  }
  func.func @transform_4(%arg0: i32) -> (i32, i32) {
    %c0_i32 = arith.constant 0 : i32
    %c0_i32_0 = arith.constant 0 : i32
    %c0_i32_1 = arith.constant 0 : i32
    return %c0_i32, %c0_i32_0 : i32, i32
  }
  func.func @transform_5(%arg0: i32) -> (i32, i32, i32) {
    %c0_i32 = arith.constant 0 : i32
    %c0_i32_0 = arith.constant 0 : i32
    %c0_i32_1 = arith.constant 0 : i32
    return %arg0, %c0_i32, %c0_i32_0 : i32, i32, i32
  }
}

</mosaic_0001>

<llo_original>
// kernel: style_conv_block_initial.1
$region0: #{style_conv_block_initial.1}
  #allocation0 [shape = 'u32[]', space=smem, size = 0x4, offset = 0x4, fixed_abs, tag = 'smem constant byte address 0x4 - core index']
  #allocation1 [shape = 'u32[144,128]{1,0:T(1,128)}', space=vmem, size = 0x12000, scoped, tag = 'internal scratch']
  #allocation2 [shape = 'f32[72,256]{1,0:T(8,128)}', space=vmem, size = 0x12000, scoped, tag = 'scratch operand']
  %s0 = inlined_call_operand.vmem [shape: f32[8,256], index: 0, kind: input, shape index: {}]
  %s1 = inlined_call_operand.vmem [shape: f32[2,1,256], index: 1, kind: input, shape index: {}]
  %s2 = inlined_call_operand.vmem [shape: f32[8,75], index: 2, kind: input, shape index: {}]
  %s3 = inlined_call_operand.vmem [shape: f32[2,8,4], index: 3, kind: input, shape index: {}]
  %s4 = inlined_call_operand.vmem [shape: f32[9,256], index: 4, kind: input, shape index: {}]
  %s5 = inlined_call_operand.vmem [shape: f32[2,8,256], index: 5, kind: output, shape index: {}]
  %s6 = sld [smem:[#allocation0]]
  $region53: #{style_conv_block_initial.1} parent=0
    _
  %s8 = ssub.s32 1, %s6
  %s9 = scalar_select 0, %s8, %s6
  loop: start=0, step=1, limit=4
  $region2: #{style_conv_block_initial.1} parent=0 // loop_pre_header
    _
  $region3: #{style_conv_block_initial.1} parent=0 // loop_header
    %s11 = sphi 0, %s15
    %p12 = scmp.ge.s32.totalorder %s11, 4
    %s19 = sphi 0, %s19
    %s21 = sphi 0, %s19
    %s22 = sphi 0, %s21
    %s36 = sphi 0, %s22
    %s42 = sphi 0, %s44
    %s45 = sphi 0, %s42
    %s46 = sphi 0, %s45
    %s62 = sphi 0, %s46
    %s66 = sphi 0, %s66
    %s68 = sphi 0, %s66
    %s69 = sphi 0, %s68
    %s83 = sphi 0, %s69
    %s89 = sphi 0, %s91
    %s92 = sphi 0, %s89
    %s93 = sphi 0, %s92
    %s109 = sphi 0, %s93
    %s113 = sphi 0, %s113
    %s115 = sphi 0, %s113
    %s116 = sphi 0, %s115
    %s130 = sphi 0, %s116
    %s136 = sphi 0, %s138
    %s139 = sphi 0, %s136
    %s140 = sphi 0, %s139
    %s156 = sphi 0, %s140
  $region4: #{style_conv_block_initial.1} parent=0 // loop_header_branch
    %14 = sbr.rel (%p12) target = $region8
  $region5: #{style_conv_block_initial.1} parent=0 // loop_body
    %s16 = ssub.s32 %s11, 1
    %s17 = ssub.s32 %s11, 2
    %s18 = sadd.s32 %s11, 1
    %s20 = sadd.s32 %s19, 1
    %p23 = scmp.eq.s32.totalorder %s11, 1
    %p24 = scmp.ne.s32.totalorder %s19, %s21
    %p25 = scmp.eq.s32.totalorder %s11, 0
    %p26 = por %p24, %p25
    %p27 = scmp.ne.s32.totalorder %s19, %s21
    %p28 = scmp.eq.s32.totalorder %s16, 1
    %p29 = por %p27, %p28
    %p30 = scmp.ne.s32.totalorder %s21, %s22
    %p31 = scmp.eq.s32.totalorder %s16, 0
    %p32 = por %p30, %p31
    %p33 = scmp.ne.s32.totalorder %s21, %s22
    %p34 = scmp.eq.s32.totalorder %s17, 1
    %p35 = por %p33, %p34
    %p37 = scmp.ne.s32.totalorder %s22, %s36
    %p38 = scmp.eq.s32.totalorder %s17, 0
    %p39 = por %p37, %p38
    %s40 = ssub.s32 %s11, %s18
    %p41 = scmp.eq.s32.totalorder %s40, 0
    %s43 = sadd.s32 %s42, 1
    %s44 = scalar_select %p41, %s42, %s43
    %p47 = pneg %p41
    %p48 = scmp.eq.s32.totalorder %s11, 1
    %p49 = por %p47, %p48
    %p50 = scmp.ne.s32.totalorder %s42, %s45
    %p51 = scmp.eq.s32.totalorder %s11, 0
    %p52 = por %p50, %p51
    %p53 = scmp.ne.s32.totalorder %s42, %s45
    %p54 = scmp.eq.s32.totalorder %s16, 1
    %p55 = por %p53, %p54
    %p56 = scmp.ne.s32.totalorder %s45, %s46
    %p57 = scmp.eq.s32.totalorder %s16, 0
    %p58 = por %p56, %p57
    %p59 = scmp.ne.s32.totalorder %s45, %s46
    %p60 = scmp.eq.s32.totalorder %s17, 1
    %p61 = por %p59, %p60
    %p63 = scmp.ne.s32.totalorder %s46, %s62
    %p64 = scmp.eq.s32.totalorder %s17, 0
    %p65 = por %p63, %p64
    %s67 = sadd.s32 %s66, 1
    %p70 = scmp.eq.s32.totalorder %s11, 1
    %p71 = scmp.ne.s32.totalorder %s66, %s68
    %p72 = scmp.eq.s32.totalorder %s11, 0
    %p73 = por %p71, %p72
    %p74 = scmp.ne.s32.totalorder %s66, %s68
    %p75 = scmp.eq.s32.totalorder %s16, 1
    %p76 = por %p74, %p75
    %p77 = scmp.ne.s32.totalorder %s68, %s69
    %p78 = scmp.eq.s32.totalorder %s16, 0
    %p79 = por %p77, %p78
    %p80 = scmp.ne.s32.totalorder %s68, %s69
    %p81 = scmp.eq.s32.totalorder %s17, 1
    %p82 = por %p80, %p81
    %p84 = scmp.ne.s32.totalorder %s69, %s83
    %p85 = scmp.eq.s32.totalorder %s17, 0
    %p86 = por %p84, %p85
    %s87 = ssub.s32 %s11, %s18
    %p88 = scmp.eq.s32.totalorder %s87, 0
    %s90 = sadd.s32 %s89, 1
    %s91 = scalar_select %p88, %s89, %s90
    %p94 = pneg %p88
    %p95 = scmp.eq.s32.totalorder %s11, 1
    %p96 = por %p94, %p95
    %p97 = scmp.ne.s32.totalorder %s89, %s92
    %p98 = scmp.eq.s32.totalorder %s11, 0
    %p99 = por %p97, %p98
    %p100 = scmp.ne.s32.totalorder %s89, %s92
    %p101 = scmp.eq.s32.totalorder %s16, 1
    %p102 = por %p100, %p101
    %p103 = scmp.ne.s32.totalorder %s92, %s93
    %p104 = scmp.eq.s32.totalorder %s16, 0
    %p105 = por %p103, %p104
    %p106 = scmp.ne.s32.totalorder %s92, %s93
    %p107 = scmp.eq.s32.totalorder %s17, 1
    %p108 = por %p106, %p107
    %p110 = scmp.ne.s32.totalorder %s93, %s109
    %p111 = scmp.eq.s32.totalorder %s17, 0
    %p112 = por %p110, %p111
    %s114 = sadd.s32 %s113, 1
    %p117 = scmp.eq.s32.totalorder %s11, 1
    %p118 = scmp.ne.s32.totalorder %s113, %s115
    %p119 = scmp.eq.s32.totalorder %s11, 0
    %p120 = por %p118, %p119
    %p121 = scmp.ne.s32.totalorder %s113, %s115
    %p122 = scmp.eq.s32.totalorder %s16, 1
    %p123 = por %p121, %p122
    %p124 = scmp.ne.s32.totalorder %s115, %s116
    %p125 = scmp.eq.s32.totalorder %s16, 0
    %p126 = por %p124, %p125
    %p127 = scmp.ne.s32.totalorder %s115, %s116
    %p128 = scmp.eq.s32.totalorder %s17, 1
    %p129 = por %p127, %p128
    %p131 = scmp.ne.s32.totalorder %s116, %s130
    %p132 = scmp.eq.s32.totalorder %s17, 0
    %p133 = por %p131, %p132
    %s134 = ssub.s32 %s11, %s18
    %p135 = scmp.eq.s32.totalorder %s134, 0
    %s137 = sadd.s32 %s136, 1
    %s138 = scalar_select %p135, %s136, %s137
    %p141 = pneg %p135
    %p142 = scmp.eq.s32.totalorder %s11, 1
    %p143 = por %p141, %p142
    %p144 = scmp.ne.s32.totalorder %s136, %s139
    %p145 = scmp.eq.s32.totalorder %s11, 0
    %p146 = por %p144, %p145
    %p147 = scmp.ne.s32.totalorder %s136, %s139
    %p148 = scmp.eq.s32.totalorder %s16, 1
    %p149 = por %p147, %p148
    %p150 = scmp.ne.s32.totalorder %s139, %s140
    %p151 = scmp.eq.s32.totalorder %s16, 0
    %p152 = por %p150, %p151
    %p153 = scmp.ne.s32.totalorder %s139, %s140
    %p154 = scmp.eq.s32.totalorder %s17, 1
    %p155 = por %p153, %p154
    %p157 = scmp.ne.s32.totalorder %s140, %s156
    %p158 = scmp.eq.s32.totalorder %s17, 0
    %p159 = por %p157, %p158
    %p160 = scmp.le.s32.totalorder 1, %s11
    %p161 = scmp.lt.s32.totalorder %s11, 3
    %p162 = pnand %p160, %p161
    %p163 = pneg %p162
    // Predicated region
    $region9: #{style_conv_block_initial.1} parent=5 // pred_check
      _
    $region10: #{style_conv_block_initial.1} parent=5 // pred_check_branch
      %165 = sbr.rel (%p162) target = $region12
    $region11: #{style_conv_block_initial.1} parent=5 // pred_region
      %s166 = ssub.s32 %s11, 1
      // Predicated region
      $region13: #{style_conv_block_initial.1} parent=11 // pred_check
        %p167 = pneg %p32
      $region14: #{style_conv_block_initial.1} parent=11 // pred_check_branch
        %169 = sbr.rel (%p167) target = $region16
      $region15: #{style_conv_block_initial.1} parent=11 // pred_region
        _
      $region16: #{style_conv_block_initial.1} parent=11 // pred_fallthru
        _
      // Predicated region
      $region17: #{style_conv_block_initial.1} parent=11 // pred_check
        %p170 = pneg %p79
      $region18: #{style_conv_block_initial.1} parent=11 // pred_check_branch
        %172 = sbr.rel (%p170) target = $region20
      $region19: #{style_conv_block_initial.1} parent=11 // pred_region
        _
      $region20: #{style_conv_block_initial.1} parent=11 // pred_fallthru
        _
      // Predicated region
      $region21: #{style_conv_block_initial.1} parent=11 // pred_check
        %p173 = pneg %p126
      $region22: #{style_conv_block_initial.1} parent=11 // pred_check_branch
        %175 = sbr.rel (%p173) target = $region24
      $region23: #{style_conv_block_initial.1} parent=11 // pred_region
        _
      $region24: #{style_conv_block_initial.1} parent=11 // pred_fallthru
        _
    $region12: #{style_conv_block_initial.1} parent=5 // pred_fallthru
      _
    %p176 = scmp.lt.s32.totalorder %s11, 2
    // Predicated region
    $region25: #{style_conv_block_initial.1} parent=5 // pred_check
      %p177 = pneg %p176
    $region26: #{style_conv_block_initial.1} parent=5 // pred_check_branch
      %179 = sbr.rel (%p177) target = $region28
    $region27: #{style_conv_block_initial.1} parent=5 // pred_region
      // Predicated region
      $region29: #{style_conv_block_initial.1} parent=27 // pred_check
        %p180 = pneg %p52
      $region30: #{style_conv_block_initial.1} parent=27 // pred_check_branch
        %182 = sbr.rel (%p180) target = $region32
      $region31: #{style_conv_block_initial.1} parent=27 // pred_region
        %p183 = scmp.lt.s32.totalorder %s11, 1
        %s184 = scalar_select %p183, %s11, 1
        %s185 = smul.addr %s184, 2
        %s186 = scalar_lea.vmem %s1, %s185
      $region32: #{style_conv_block_initial.1} parent=27 // pred_fallthru
        _
      // Predicated region
      $region33: #{style_conv_block_initial.1} parent=27 // pred_check
        %p187 = pneg %p99
      $region34: #{style_conv_block_initial.1} parent=27 // pred_check_branch
        %189 = sbr.rel (%p187) target = $region36
      $region35: #{style_conv_block_initial.1} parent=27 // pred_region
        %p190 = scmp.lt.s32.totalorder %s11, 1
        %s191 = scalar_select %p190, %s11, 1
        %s192 = smul.addr %s191, 8
        %s193 = scalar_lea.vmem %s3, %s192
      $region36: #{style_conv_block_initial.1} parent=27 // pred_fallthru
        _
    $region28: #{style_conv_block_initial.1} parent=5 // pred_fallthru
      _
    %p194 = scmp.le.s32.totalorder 1, %s11
    %p195 = scmp.lt.s32.totalorder %s11, 3
    %p196 = pnand %p194, %p195
    %p197 = pneg %p196
    // Predicated region
    $region37: #{style_conv_block_initial.1} parent=5 // pred_check
      _
    $region38: #{style_conv_block_initial.1} parent=5 // pred_check_branch
      %199 = sbr.rel (%p196) target = $region40
    $region39: #{style_conv_block_initial.1} parent=5 // pred_region
      %s200 = ssub.s32 %s11, 1
      %p201 = pneg %p32
      %p202 = pneg %p29
      %p203 = scmp.lt.s32.totalorder %s16, 1
      %s204 = scalar_select %p203, %s16, 1
      %s205 = smul.addr %s204, 2
      %s206 = scalar_lea.vmem %s1, %s205
      %p207 = pneg %p58
      %p208 = pneg %p55
      %p209 = pneg %p79
      %p210 = pneg %p76
      %p211 = scmp.lt.s32.totalorder %s16, 1
      %s212 = scalar_select %p211, %s16, 1
      %s213 = smul.addr %s212, 8
      %s214 = scalar_lea.vmem %s3, %s213
      %p215 = pneg %p105
      %p216 = pneg %p102
      %p217 = pneg %p126
      %p218 = pneg %p123
      %p219 = pneg %p152
      %p220 = pneg %p149
      %p221 = scmp.lt.s32.totalorder %s16, 1
      %s222 = scalar_select %p221, %s16, 1
      %s223 = smul.addr %s222, 2
      %s224 = smul.addr %s223, 8
      %s225 = scalar_lea.vmem %s5, %s224
      %p226 = scmp.lt.s32.totalorder %s16, 1
      %s227 = scalar_select %p226, %s16, 1
      %s228 = smul.addr %s227, 2
      %s229 = scalar_lea.vmem %s1, %s228
      %p230 = scmp.lt.s32.totalorder %s16, 1
      %s231 = scalar_select %p230, %s16, 1
      %s232 = smul.addr %s231, 8
      %s233 = scalar_lea.vmem %s3, %s232
      %p234 = scmp.lt.s32.totalorder %s16, 1
      %s235 = scalar_select %p234, %s16, 1
      %s236 = smul.addr %s235, 2
      %s237 = smul.addr %s236, 8
      %s238 = scalar_lea.vmem %s5, %s237
      %v239 = vld [vmem:[%s2] sm:$0xff]
      %v240 = vld [vmem:[%s233] sm:$0xff]
      %v241 = vld [vmem:[%s229] sm:$0x3]
      %v242 = vld [vmem:[%s0] sm:$0xff]
      %v243 = vld [vmem:[%s0 + $0x8] sm:$0xff]
      %v245 = vlaneseq
      %v246 = vshrl.u32 %v245, 7
      %v247 = vsub.s32 0, %v246
      %v248 = vrot.slane %v241, %v247
      %v249 = vlaneseq
      %v250 = vshrl.u32 %v249, 7
      %v251 = vsub.s32 1, %v250
      %v252 = vrot.slane %v241, %v251
      %256 = vset.pattern.permute.xlu0 73
      %257 = vperm.xlu0 %256, %v239
      %v258 = vpop.permute.xlu0 %257
      %v260 = vmul.f32 %v248, %v258
      %v261 = vmul.f32 %v252, %v258
      %v262 = vadd.f32 %v242, %v260
      %v263 = vadd.f32 %v243, %v261
      %v264 = vadd.f32 %v262, %v263
      %265 = vadd.xlane.f32.xlu0 %v264
      %v266 = vpop.xlane.xlu0 %265
      %v267 = vrcp.pop 256.0
      %v268 = vmul.f32 %v266, %v267
      %v269 = vmul.f32 %v262, %v262
      %v270 = vmul.f32 %v263, %v263
      %v271 = vadd.f32 %v269, %v270
      %272 = vadd.xlane.f32.xlu0 %v271
      %v273 = vpop.xlane.xlu0 %272
      %v274 = vmul.f32 %v273, %v267
      %v275 = vmul.f32 %v268, %v268
      %v276 = vsub.f32 %v274, %v275
      %v277 = vmax.f32 %v276, 0.0
      %v278 = vadd.f32 %v277, 1e-05
      %v279 = vrsqrt.pop %v278
      %v280 = vmul.f32 %v279, %v240
      %v281 = vmul.f32 %v268, %v280
      %283 = vrot.lane.b32.xlu0 %v281, 1
      %v284 = vpop.permute.xlu0 %283
      %v286 = vsub.f32 %v240, %v284
      %288 = vset.pattern.permute.xlu0 0
      %289 = vperm.xlu0 %288, %v280
      %v290 = vpop.permute.xlu0 %289
      %v292 = vmul.f32 %v262, %v290
      %v293 = vmul.f32 %v263, %v290
      %295 = vset.pattern.permute.xlu0 1
      %296 = vperm.xlu0 %295, %v286
      %v297 = vpop.permute.xlu0 %296
      %v299 = vadd.f32 %v292, %v297
      %v300 = vadd.f32 %v293, %v297
      %v301 = vmul.f32 %v299, 0.2
      %v302 = vmul.f32 %v300, 0.2
      %v303 = vmax.f32 %v299, %v301
      %v304 = vmax.f32 %v300, %v302
      %v305 = vld [vmem:[%s4] sm:$0xff]
      %v306 = vld [vmem:[%s4 + $0x8] sm:$0xff]
      %v307 = vld [vmem:[%s4 + $0x10] sm:$0x1]
      %v308 = vld [vmem:[%s4 + $0x18] sm:$0x1]
      %310 = vrot.lane.b32.xlu0 %v304, 17
      %v311 = vpop.permute.xlu0 %310
      %314 = vrot.lane.b32.xlu0 %v303, 17
      %v315 = vpop.permute.xlu0 %314
      %vm316 = vcmask 138240
      %v317 = vsel %vm316, %v315, %v311
      %v320 = vsel %vm316, %v311, %v315
      %v321 = vlaneseq
      %v322 = vshrl.u32 %v321, 7
      %v323 = vsub.s32 0, %v322
      %v324 = vrot.slane %v305, %v323
      %v325 = vlaneseq
      %v326 = vshrl.u32 %v325, 7
      %v327 = vsub.s32 0, %v326
      %v328 = vrot.slane %v306, %v327
      %v329 = vmul.f32 %v320, %v324
      %v330 = vmul.f32 %v317, %v328
      %331 = vst [vmem:[#allocation2] sm:$0xff] %v329
      %332 = vst [vmem:[#allocation2 + $0x8] sm:$0xff] %v330
      %333 = vrot.lane.b32.xlu0 %v304, 16
      %v334 = vpop.permute.xlu0 %333
      %336 = vrot.lane.b32.xlu0 %v303, 16
      %v337 = vpop.permute.xlu0 %336
      %vm338 = vcmask 130048
      %v339 = vsel %vm338, %v337, %v334
      %v342 = vsel %vm338, %v334, %v337
      %v343 = vlaneseq
      %v344 = vshrl.u32 %v343, 7
      %v345 = vsub.s32 1, %v344
      %v346 = vrot.slane %v305, %v345
      %v347 = vlaneseq
      %v348 = vshrl.u32 %v347, 7
      %v349 = vsub.s32 1, %v348
      %v350 = vrot.slane %v306, %v349
      %v351 = vmul.f32 %v342, %v346
      %v352 = vmul.f32 %v339, %v350
      %353 = vst [vmem:[#allocation2 + $0x10] sm:$0xff] %v351
      %354 = vst [vmem:[#allocation2 + $0x18] sm:$0xff] %v352
      %355 = vrot.lane.b32.xlu0 %v304, 15
      %v356 = vpop.permute.xlu0 %355
      %358 = vrot.lane.b32.xlu0 %v303, 15
      %v359 = vpop.permute.xlu0 %358
      %vm360 = vcmask 121856
      %v361 = vsel %vm360, %v359, %v356
      %v364 = vsel %vm360, %v356, %v359
      %v365 = vlaneseq
      %v366 = vshrl.u32 %v365, 7
      %v367 = vsub.s32 2, %v366
      %v368 = vrot.slane %v305, %v367
      %v369 = vlaneseq
      %v370 = vshrl.u32 %v369, 7
      %v371 = vsub.s32 2, %v370
      %v372 = vrot.slane %v306, %v371
      %v373 = vmul.f32 %v364, %v368
      %v374 = vmul.f32 %v361, %v372
      %375 = vst [vmem:[#allocation2 + $0x20] sm:$0xff] %v373
      %376 = vst [vmem:[#allocation2 + $0x28] sm:$0xff] %v374
      %377 = vrot.lane.b32.xlu0 %v304, 1
      %v378 = vpop.permute.xlu0 %377
      %380 = vrot.lane.b32.xlu0 %v303, 1
      %v381 = vpop.permute.xlu0 %380
      %vm382 = vcmask 7168
      %v383 = vsel %vm382, %v381, %v378
      %v386 = vsel %vm382, %v378, %v381
      %v387 = vlaneseq
      %v388 = vshrl.u32 %v387, 7
      %v389 = vsub.s32 3, %v388
      %v390 = vrot.slane %v305, %v389
      %v391 = vlaneseq
      %v392 = vshrl.u32 %v391, 7
      %v393 = vsub.s32 3, %v392
      %v394 = vrot.slane %v306, %v393
      %v395 = vmul.f32 %v386, %v390
      %v396 = vmul.f32 %v383, %v394
      %397 = vst [vmem:[#allocation2 + $0x30] sm:$0xff] %v395
      %398 = vst [vmem:[#allocation2 + $0x38] sm:$0xff] %v396
      %399 = vst [vmem:[#allocation2 + $0x40] sm:$0xff] %v303
      %400 = vst [vmem:[#allocation2 + $0x48] sm:$0xff] %v304
      %401 = vrot.lane.b32.xlu0 %v303, 127
      %v402 = vpop.permute.xlu0 %401
      %403 = vrot.lane.b32.xlu0 %v304, 127
      %v404 = vpop.permute.xlu0 %403
      %vm405 = vcmask 1039360
      %v406 = vsel %vm405, %v402, %v404
      %v410 = vsel %vm405, %v404, %v402
      %v411 = vlaneseq
      %v412 = vshrl.u32 %v411, 7
      %v413 = vsub.s32 5, %v412
      %v414 = vrot.slane %v305, %v413
      %v415 = vlaneseq
      %v416 = vshrl.u32 %v415, 7
      %v417 = vsub.s32 5, %v416
      %v418 = vrot.slane %v306, %v417
      %v419 = vmul.f32 %v406, %v414
      %v420 = vmul.f32 %v410, %v418
      %421 = vst [vmem:[#allocation2 + $0x50] sm:$0xff] %v419
      %422 = vst [vmem:[#allocation2 + $0x58] sm:$0xff] %v420
      %423 = vrot.lane.b32.xlu0 %v303, 113
      %v424 = vpop.permute.xlu0 %423
      %425 = vrot.lane.b32.xlu0 %v304, 113
      %v426 = vpop.permute.xlu0 %425
      %vm427 = vcmask 924672
      %v428 = vsel %vm427, %v424, %v426
      %v432 = vsel %vm427, %v426, %v424
      %v433 = vlaneseq
      %v434 = vshrl.u32 %v433, 7
      %v435 = vsub.s32 6, %v434
      %v436 = vrot.slane %v305, %v435
      %v437 = vlaneseq
      %v438 = vshrl.u32 %v437, 7
      %v439 = vsub.s32 6, %v438
      %v440 = vrot.slane %v306, %v439
      %v441 = vmul.f32 %v428, %v436
      %v442 = vmul.f32 %v432, %v440
      %443 = vst [vmem:[#allocation2 + $0x60] sm:$0xff] %v441
      %444 = vst [vmem:[#allocation2 + $0x68] sm:$0xff] %v442
      %445 = vrot.lane.b32.xlu0 %v303, 112
      %v446 = vpop.permute.xlu0 %445
      %447 = vrot.lane.b32.xlu0 %v304, 112
      %v448 = vpop.permute.xlu0 %447
      %vm449 = vcmask 916480
      %v450 = vsel %vm449, %v446, %v448
      %v454 = vsel %vm449, %v448, %v446
      %v455 = vlaneseq
      %v456 = vshrl.u32 %v455, 7
      %v457 = vsub.s32 7, %v456
      %v458 = vrot.slane %v305, %v457
      %v459 = vlaneseq
      %v460 = vshrl.u32 %v459, 7
      %v461 = vsub.s32 7, %v460
      %v462 = vrot.slane %v306, %v461
      %v463 = vmul.f32 %v450, %v458
      %v464 = vmul.f32 %v454, %v462
      %465 = vst [vmem:[#allocation2 + $0x70] sm:$0xff] %v463
      %466 = vst [vmem:[#allocation2 + $0x78] sm:$0xff] %v464
      %467 = vrot.lane.b32.xlu0 %v303, 111
      %v468 = vpop.permute.xlu0 %467
      %469 = vrot.lane.b32.xlu0 %v304, 111
      %v470 = vpop.permute.xlu0 %469
      %vm471 = vcmask 908288
      %v472 = vsel %vm471, %v468, %v470
      %v476 = vsel %vm471, %v470, %v468
      %v477 = vlaneseq
      %v478 = vshrl.u32 %v477, 7
      %v479 = vsub.s32 0, %v478
      %v480 = vrot.slane %v307, %v479
      %v481 = vlaneseq
      %v482 = vshrl.u32 %v481, 7
      %v483 = vsub.s32 0, %v482
      %v484 = vrot.slane %v308, %v483
      %v485 = vmul.f32 %v472, %v480
      %v486 = vmul.f32 %v476, %v484
      %487 = vst [vmem:[#allocation2 + $0x80] sm:$0xff] %v485
      %488 = vst [vmem:[#allocation2 + $0x88] sm:$0xff] %v486
      %v489 = vld [vmem:[#allocation2] sm:$0xff]
      %v490 = vld [vmem:[#allocation2 + $0x8] sm:$0xff]
      %v491 = vld [vmem:[#allocation2 + $0x10] sm:$0xff]
      %v492 = vld [vmem:[#allocation2 + $0x18] sm:$0xff]
      %v493 = vld [vmem:[#allocation2 + $0x20] sm:$0xff]
      %v494 = vld [vmem:[#allocation2 + $0x28] sm:$0xff]
      %v495 = vld [vmem:[#allocation2 + $0x30] sm:$0xff]
      %v496 = vld [vmem:[#allocation2 + $0x38] sm:$0xff]
      %v497 = vld [vmem:[#allocation2 + $0x40] sm:$0xff]
      %v498 = vld [vmem:[#allocation2 + $0x48] sm:$0xff]
      %v499 = vld [vmem:[#allocation2 + $0x50] sm:$0xff]
      %v500 = vld [vmem:[#allocation2 + $0x58] sm:$0xff]
      %v501 = vld [vmem:[#allocation2 + $0x60] sm:$0xff]
      %v502 = vld [vmem:[#allocation2 + $0x68] sm:$0xff]
      %v503 = vld [vmem:[#allocation2 + $0x70] sm:$0xff]
      %v504 = vld [vmem:[#allocation2 + $0x78] sm:$0xff]
      %v505 = vld [vmem:[#allocation2 + $0x80] sm:$0xff]
      %v506 = vld [vmem:[#allocation2 + $0x88] sm:$0xff]
      %507 = vset.pattern.permute.xlu0 72
      %508 = vperm.xlu0 %507, %v239
      %v509 = vpop.permute.xlu0 %508
      %vm511 = vcmask 588800
      %v512 = vsel %vm511, %v239, 0
      %514 = vmatprep.subr.mxu0 %v490
      %515 = vmatpush1.msra.mxu0 %v489
      %516 = vmatprep.subr.mxu0 %v492
      %517 = vmatpush1.msra.mxu0 %v491
      %518 = vmatprep.subr.mxu0 %v494
      %519 = vmatpush1.msra.mxu0 %v493
      %520 = vmatprep.subr.mxu0 %v496
      %521 = vmatpush1.msra.mxu0 %v495
      %522 = vmatprep.subr.mxu0 %v498
      %523 = vmatpush1.msra.mxu0 %v497
      %524 = vmatprep.subr.mxu0 %v500
      %525 = vmatpush1.msra.mxu0 %v499
      %526 = vmatprep.subr.mxu0 %v502
      %527 = vmatpush1.msra.mxu0 %v501
      %528 = vmatprep.subr.mxu0 %v504
      %529 = vmatpush1.msra.mxu0 %v503
      %530 = vmatprep.subr.mxu0 %v506
      %531 = vmatpush1.msra.mxu0 %v505
      %532 = vmatprep.subr.mxu0 0.0
      %533 = vmatpush1.msra.mxu0 0.0
      %534 = vmatprep.subr.mxu0 0.0
      %535 = vmatpush1.msra.mxu0 0.0
      %536 = vmatprep.subr.mxu0 0.0
      %537 = vmatpush1.msra.mxu0 0.0
      %538 = vmatprep.subr.mxu0 0.0
      %539 = vmatpush1.msra.mxu0 0.0
      %540 = vmatprep.subr.mxu0 0.0
      %541 = vmatpush1.msra.mxu0 0.0
      %542 = vmatprep.subr.mxu0 0.0
      %543 = vmatpush1.msra.mxu0 0.0
      %544 = vmatprep.subr.mxu0 0.0
      %545 = vmatpush1.msra.mxu0 0.0
      %546 = vmatprep.subr.mxu0 0.0
      %547 = vmatpush1.msra.mxu0 0.0
      %548 = vmatprep.subr.mxu0 0.0
      %549 = vmatpush1.msra.mxu0 0.0
      %550 = vmatprep.subr.mxu0 0.0
      %551 = vmatpush1.msra.mxu0 0.0
      %552 = vmatprep.subr.mxu0 0.0
      %553 = vmatpush1.msra.mxu0 0.0
      %554 = vmatprep.subr.mxu0 0.0
      %555 = vmatpush1.msra.mxu0 0.0
      %556 = vmatprep.subr.mxu0 0.0
      %557 = vmatpush1.msra.mxu0 0.0
      %558 = vmatprep.subr.mxu0 0.0
      %559 = vmatpush1.msra.mxu0 0.0
      %560 = vmatprep.subr.mxu0 0.0
      %561 = vmatpush1.msra.mxu0 0.0
      %562 = vmatprep.subr.mxu0 0.0
      %563 = vmatpush1.msra.mxu0 0.0
      %564 = vmatprep.subr.mxu0 0.0
      %565 = vmatpush1.msra.mxu0 0.0
      %566 = vmatprep.subr.mxu0 0.0
      %567 = vmatpush1.msra.mxu0 0.0
      %568 = vmatprep.subr.mxu0 0.0
      %569 = vmatpush1.msra.mxu0 0.0
      %570 = vmatprep.subr.mxu0 0.0
      %571 = vmatpush1.msra.mxu0 0.0
      %572 = vmatprep.subr.mxu0 0.0
      %573 = vmatpush1.msra.mxu0 0.0
      %574 = vmatprep.subr.mxu0 0.0
      %575 = vmatpush1.msra.mxu0 0.0
      %576 = vmatprep.subr.mxu0 0.0
      %577 = vmatpush1.msra.mxu0 0.0
      %578 = vmatprep.mubr.f32.mxu0 0.0
      %579 = vmatmul.mubr.f32.gmra.mrb[0].mxu0 %v512
      %v580 = vpop.f32.mrb[0].mxu0
      %v581 = vadd.f32 %v509, %v580
      %v582 = vpop.f32.mrb[0].mxu0
      %v583 = vadd.f32 %v509, %v582
      %584 = vdwg.mxu0
      %585 = vset.pattern.permute.xlu0 74
      %586 = vperm.xlu0 %585, %v239
      %v587 = vpop.permute.xlu0 %586
      %v589 = vmul.f32 %v248, %v587
      %v590 = vmul.f32 %v252, %v587
      %v591 = vadd.f32 %v581, %v589
      %v592 = vadd.f32 %v583, %v590
      %v593 = vadd.f32 %v591, %v592
      %594 = vadd.xlane.f32.xlu0 %v593
      %v595 = vpop.xlane.xlu0 %594
      %v596 = vmul.f32 %v595, %v267
      %v597 = vmul.f32 %v591, %v591
      %v598 = vmul.f32 %v592, %v592
      %v599 = vadd.f32 %v597, %v598
      %600 = vadd.xlane.f32.xlu0 %v599
      %v601 = vpop.xlane.xlu0 %600
      %v602 = vmul.f32 %v601, %v267
      %v603 = vmul.f32 %v596, %v596
      %v604 = vsub.f32 %v602, %v603
      %v605 = vmax.f32 %v604, 0.0
      %v606 = vadd.f32 %v605, 1e-05
      %v607 = vrsqrt.pop %v606
      %v608 = vmul.f32 %v607, %v240
      %v609 = vmul.f32 %v596, %v608
      %611 = vrot.lane.b32.xlu0 %v609, 1
      %v612 = vpop.permute.xlu0 %611
      %v614 = vsub.f32 %v240, %v612
      %616 = vset.pattern.permute.xlu0 2
      %617 = vperm.xlu0 %616, %v608
      %v618 = vpop.permute.xlu0 %617
      %v620 = vmul.f32 %v591, %v618
      %v621 = vmul.f32 %v592, %v618
      %623 = vset.pattern.permute.xlu0 3
      %624 = vperm.xlu0 %623, %v614
      %v625 = vpop.permute.xlu0 %624
      %v627 = vadd.f32 %v620, %v625
      %v628 = vadd.f32 %v621, %v625
      %v629 = vmul.f32 %v627, 0.2
      %v630 = vmul.f32 %v628, 0.2
      %v631 = vmax.f32 %v627, %v629
      %v632 = vmax.f32 %v628, %v630
      %633 = vst [vmem:[%s238] sm:$0xff] %v631
      %634 = vst [vmem:[%s238 + $0x8] sm:$0xff] %v632
      %p635 = scmp.lt.s32.totalorder %s16, 1
      %s636 = scalar_select %p635, %s16, 1
      %s637 = smul.addr %s636, 2
      %s638 = smul.addr %s637, 8
      %s639 = scalar_lea.vmem %s5, %s638
      // Predicated region
      $region41: #{style_conv_block_initial.1} parent=39 // pred_check
        %p640 = pneg %p149
      $region42: #{style_conv_block_initial.1} parent=39 // pred_check_branch
        %642 = sbr.rel (%p640) target = $region44
      $region43: #{style_conv_block_initial.1} parent=39 // pred_region
        _
      $region44: #{style_conv_block_initial.1} parent=39 // pred_fallthru
        _
    $region40: #{style_conv_block_initial.1} parent=5 // pred_fallthru
      _
    %p643 = scmp.le.s32.totalorder 2, %s11
    // Predicated region
    $region45: #{style_conv_block_initial.1} parent=5 // pred_check
      %p644 = pneg %p643
    $region46: #{style_conv_block_initial.1} parent=5 // pred_check_branch
      %646 = sbr.rel (%p644) target = $region48
    $region47: #{style_conv_block_initial.1} parent=5 // pred_region
      %s647 = ssub.s32 %s11, 2
      // Predicated region
      $region49: #{style_conv_block_initial.1} parent=47 // pred_check
        %p648 = pneg %p155
      $region50: #{style_conv_block_initial.1} parent=47 // pred_check_branch
        %650 = sbr.rel (%p648) target = $region52
      $region51: #{style_conv_block_initial.1} parent=47 // pred_region
        %p651 = scmp.lt.s32.totalorder %s17, 1
        %s652 = scalar_select %p651, %s17, 1
        %s653 = smul.addr %s652, 2
        %s654 = smul.addr %s653, 8
        %s655 = scalar_lea.vmem %s5, %s654
      $region52: #{style_conv_block_initial.1} parent=47 // pred_fallthru
        _
    $region48: #{style_conv_block_initial.1} parent=5 // pred_fallthru
      _
  $region6: #{style_conv_block_initial.1} parent=0 // loop_footer
    %s15 = sadd.s32 1, %s11
  $region7: #{style_conv_block_initial.1} parent=0 // loop_footer_branch
    %10 = sbr.rel target = $region3
  $region8: #{style_conv_block_initial.1} parent=0 // loop_exit
    _

</llo_original>
